<compile_context>
chip_gen: v5e
topology: v5e:2x2
jax: 0.10.0
libtpu: 0.0.40
codegen_flags: <defaults>
</compile_context>

<pallas_src>
import jax
import jax.numpy as jnp
from jax.experimental import pallas as pl
from jax.experimental.pallas import tpu as pltpu


def _round_up(n, m):
    return ((n + m - 1) // m) * m


def _mlp_kernel(x_ref, w1_ref, b1_ref, w2_ref, b2_ref, w3_ref, b3_ref, o_ref):
    # In-kernel bf16 cast (VPU, hidden under the DMA) instead of a wrapper-side
    # XLA convert pass over HBM.
    xb = x_ref[...].astype(jnp.bfloat16)
    # Layer 1: Linear(input_size, 64) + ReLU  (bf16 operands, f32 accumulate)
    h1 = jnp.dot(xb, w1_ref[...], preferred_element_type=jnp.float32)
    h1 = jnp.maximum(h1 + b1_ref[...], 0.0).astype(jnp.bfloat16)
    # Layer 2: Linear(64, 32) + ReLU
    h2 = jnp.dot(h1, w2_ref[...], preferred_element_type=jnp.float32)
    h2 = jnp.maximum(h2 + b2_ref[...], 0.0)
    # Output layer: Linear(32, 4), f32 for fidelity, no activation.
    out = jnp.dot(h2, w3_ref[...], preferred_element_type=jnp.float32)
    o_ref[...] = out + b3_ref[...]


def prepare_params(params):
    """One-time weight prep (hoisted out of the forward path).

    Weights are stored (in_features, out_features) i.e. already transposed
    relative to nn.Linear.  Layers 1/2 -> bf16, final layer + biases -> f32.
    """
    return {
        "w1": params["w1"].astype(jnp.bfloat16),
        "b1": params["b1"].astype(jnp.float32).reshape(1, -1),
        "w2": params["w2"].astype(jnp.bfloat16),
        "b2": params["b2"].astype(jnp.float32).reshape(1, -1),
        "w3": params["w3"].astype(jnp.float32),
        "b3": params["b3"].astype(jnp.float32).reshape(1, -1),
    }


def salary_predictor_forward(x, prepared, *, batch_tile=None):
    """x: (B, input_size) float32.  prepared: output of prepare_params."""
    B, D_in = x.shape
    w1, b1 = prepared["w1"], prepared["b1"]   # (D_in, 64) bf16, (1, 64) f32
    w2, b2 = prepared["w2"], prepared["b2"]   # (64, 32)  bf16, (1, 32) f32
    w3, b3 = prepared["w3"], prepared["b3"]   # (32, 4)   f32,  (1, 4)  f32
    H1, H2, D_out = w1.shape[1], w2.shape[1], w3.shape[1]

    # --- batch tiling heuristic: 1024-4096 rows, multiple of 8 ---------------
    # (Sweep up to 8192-16384 on v6e/v7x per the review; 4096 keeps VMEM usage
    #  ~10 MiB, comfortably inside the 32 MiB scoped limit on every generation.)
    if batch_tile is None:
        tgt = _round_up(pl.cdiv(max(B, 1), 8), 256)
        batch_tile = min(max(tgt, 1024), 4096)
    batch_tile = max(_round_up(batch_tile, 8), 8)
    batch_tile = min(batch_tile, _round_up(B, 8))

    # No full-array padding: only if the (single) tile exceeds the batch do we
    # pad, and then by at most 7 rows (batch_tile <= round_up(B, 8)).
    x_in, rows = x, B
    if batch_tile > B:
        x_in = jnp.pad(x, ((0, batch_tile - B), (0, 0)))
        rows = batch_tile

    grid = (pl.cdiv(rows, batch_tile),)

    out = pl.pallas_call(
        _mlp_kernel,
        out_shape=jax.ShapeDtypeStruct((rows, D_out), jnp.float32),
        grid_spec=pltpu.PrefetchScalarGridSpec(
            num_scalar_prefetch=0,
            grid=grid,
            in_specs=[
                pl.BlockSpec((batch_tile, D_in), lambda i: (i, 0)),
                pl.BlockSpec((D_in, H1), lambda i: (0, 0)),
                pl.BlockSpec((1, H1), lambda i: (0, 0)),
                pl.BlockSpec((H1, H2), lambda i: (0, 0)),
                pl.BlockSpec((1, H2), lambda i: (0, 0)),
                pl.BlockSpec((H2, D_out), lambda i: (0, 0)),
                pl.BlockSpec((1, D_out), lambda i: (0, 0)),
            ],
            # Narrow f32 output block: last dim equals the full array dim (4),
            # so the spec is legal; HBM writeback is only the 16 useful B/row.
            out_specs=pl.BlockSpec((batch_tile, D_out), lambda i: (i, 0)),
        ),
        compiler_params=pltpu.CompilerParams(
            dimension_semantics=("parallel",),
            vmem_limit_bytes=32 << 20,
        ),
    )(x_in, w1, b1, w2, b2, w3, b3)

    return out[:B] if rows != B else out


def init_params(key, input_size):
    """Deterministic init mimicking nn.Linear's U(-1/sqrt(fan_in), 1/sqrt(fan_in)).
    Weights stored as (in_features, out_features) — i.e. already transposed."""
    dims = [(input_size, 64), (64, 32), (32, 4)]
    params = {}
    for idx, (fan_in, fan_out) in enumerate(dims, start=1):
        key, kw, kb = jax.random.split(key, 3)
        bound = 1.0 / jnp.sqrt(float(fan_in))
        params[f"w{idx}"] = jax.random.uniform(
            kw, (fan_in, fan_out), jnp.float32, minval=-bound, maxval=bound)
        params[f"b{idx}"] = jax.random.uniform(
            kb, (1, fan_out), jnp.float32, minval=-bound, maxval=bound)
    return params


def reference_forward_mixed(x, params):
    """Same mixed-precision recipe as the kernel (bf16 layers 1/2, f32 layer 3)."""
    bf = jnp.bfloat16
    h1 = jnp.dot(x.astype(bf), params["w1"].astype(bf),
                 preferred_element_type=jnp.float32) + params["b1"]
    h1 = jnp.maximum(h1, 0.0)
    h2 = jnp.dot(h1.astype(bf), params["w2"].astype(bf),
                 preferred_element_type=jnp.float32) + params["b2"]
    h2 = jnp.maximum(h2, 0.0)
    return jnp.dot(h2, params["w3"],
                   preferred_element_type=jnp.float32) + params["b3"]


def reference_forward_f32(x, params):
    """Pure-f32 reference matching the PyTorch model's numerics."""
    h1 = jnp.maximum(x @ params["w1"] + params["b1"], 0.0)
    h2 = jnp.maximum(h1 @ params["w2"] + params["b2"], 0.0)
    return h2 @ params["w3"] + params["b3"]


if __name__ == "__main__":
    key = jax.random.PRNGKey(0)
    key, kx, kx2 = jax.random.split(key, 3)

    batch, input_size = 8, 16
    raw_params = init_params(key, input_size)
    params = prepare_params(raw_params)   # one-time weight prep

    # Small batch: single tile, single grid step.
    x = jax.random.normal(kx, (batch, input_size), jnp.float32)
    out = jax.block_until_ready(salary_predictor_forward(x, params))
    assert out.shape == (batch, 4), out.shape
    ref_m = reference_forward_mixed(x, raw_params)
    ref_f = reference_forward_f32(x, raw_params)
    assert jnp.allclose(out, ref_m, atol=2e-3, rtol=2e-3), "mismatch vs mixed ref (small)"
    assert jnp.allclose(out, ref_f, atol=6e-2, rtol=6e-2), "mismatch vs f32 ref (small)"

    # Ragged batch: multi-step grid with a partial final block (no full-array pad).
    batch2 = 300
    x2 = jax.random.normal(kx2, (batch2, input_size), jnp.float32)
    out2 = jax.block_until_ready(
        salary_predictor_forward(x2, params, batch_tile=128))
    assert out2.shape == (batch2, 4), out2.shape
    ref2 = reference_forward_mixed(x2, raw_params)
    assert jnp.allclose(out2, ref2, atol=2e-3, rtol=2e-3), "mismatch vs mixed ref (ragged)"

    print("KERNEL_OK")
</pallas_src>

<mosaic_0001>
module attributes {stable_mosaic.version = 11 : i64} {
  func.func @_mlp_kernel(%arg0: i32, %arg1: memref<8x16xf32, #tpu.memory_space<vmem>>, %arg2: memref<16x64xbf16, #tpu.memory_space<vmem>>, %arg3: memref<1x64xf32, #tpu.memory_space<vmem>>, %arg4: memref<64x32xbf16, #tpu.memory_space<vmem>>, %arg5: memref<1x32xf32, #tpu.memory_space<vmem>>, %arg6: memref<32x4xf32, #tpu.memory_space<vmem>>, %arg7: memref<1x4xf32, #tpu.memory_space<vmem>>, %arg8: memref<8x4xf32, #tpu.memory_space<vmem>>) attributes {dimension_semantics = [#tpu.dimension_semantics<parallel>], iteration_bounds = array<i64: 1>, scalar_prefetch = 0 : i64, scratch_operands = 0 : i64, tpu.core_type = #tpu.core_type<tc>, window_params = [{transform_indices = @transform_0, window_bounds = array<i64: 8, 16>}, {pipeline_mode = #tpu.pipeline_mode<synchronous>, transform_indices = @transform_1, window_bounds = array<i64: 16, 64>}, {pipeline_mode = #tpu.pipeline_mode<synchronous>, transform_indices = @transform_2, window_bounds = array<i64: 1, 64>}, {pipeline_mode = #tpu.pipeline_mode<synchronous>, transform_indices = @transform_3, window_bounds = array<i64: 64, 32>}, {pipeline_mode = #tpu.pipeline_mode<synchronous>, transform_indices = @transform_4, window_bounds = array<i64: 1, 32>}, {pipeline_mode = #tpu.pipeline_mode<synchronous>, transform_indices = @transform_5, window_bounds = array<i64: 32, 4>}, {pipeline_mode = #tpu.pipeline_mode<synchronous>, transform_indices = @transform_6, window_bounds = array<i64: 1, 4>}, {transform_indices = @transform_7, window_bounds = array<i64: 8, 4>}]} {
    %c0 = arith.constant 0 : index
    %c0_0 = arith.constant 0 : index
    %0 = vector.load %arg1[%c0, %c0_0] : memref<8x16xf32, #tpu.memory_space<vmem>>, vector<8x16xf32>
    %1 = arith.truncf %0 : vector<8x16xf32> to vector<8x16xbf16>
    %c0_1 = arith.constant 0 : index
    %c0_2 = arith.constant 0 : index
    %2 = vector.load %arg2[%c0_1, %c0_2] : memref<16x64xbf16, #tpu.memory_space<vmem>>, vector<16x64xbf16>
    %cst = arith.constant dense<0.000000e+00> : vector<8x64xf32>
    %3 = tpu.matmul %1, %2, %cst {dimension_numbers = #tpu.dot_dimension_numbers<[1], [0], [0], [1], [0, 0, 1, 1], [], []>} : vector<8x16xbf16>, vector<16x64xbf16>, vector<8x64xf32> -> vector<8x64xf32>
    %c0_3 = arith.constant 0 : index
    %c0_4 = arith.constant 0 : index
    %4 = vector.load %arg3[%c0_3, %c0_4] : memref<1x64xf32, #tpu.memory_space<vmem>>, vector<1x64xf32>
    %5 = vector.broadcast %4 : vector<1x64xf32> to vector<8x64xf32>
    %6 = arith.addf %3, %5 : vector<8x64xf32>
    %cst_5 = arith.constant 0.000000e+00 : f32
    %7 = vector.broadcast %cst_5 : f32 to vector<8x64xf32>
    %8 = arith.maximumf %6, %7 : vector<8x64xf32>
    %9 = arith.truncf %8 : vector<8x64xf32> to vector<8x64xbf16>
    %c0_6 = arith.constant 0 : index
    %c0_7 = arith.constant 0 : index
    %10 = vector.load %arg4[%c0_6, %c0_7] : memref<64x32xbf16, #tpu.memory_space<vmem>>, vector<64x32xbf16>
    %cst_8 = arith.constant dense<0.000000e+00> : vector<8x32xf32>
    %11 = tpu.matmul %9, %10, %cst_8 {dimension_numbers = #tpu.dot_dimension_numbers<[1], [0], [0], [1], [0, 0, 1, 1], [], []>} : vector<8x64xbf16>, vector<64x32xbf16>, vector<8x32xf32> -> vector<8x32xf32>
    %c0_9 = arith.constant 0 : index
    %c0_10 = arith.constant 0 : index
    %12 = vector.load %arg5[%c0_9, %c0_10] : memref<1x32xf32, #tpu.memory_space<vmem>>, vector<1x32xf32>
    %13 = vector.broadcast %12 : vector<1x32xf32> to vector<8x32xf32>
    %14 = arith.addf %11, %13 : vector<8x32xf32>
    %cst_11 = arith.constant 0.000000e+00 : f32
    %15 = vector.broadcast %cst_11 : f32 to vector<8x32xf32>
    %16 = arith.maximumf %14, %15 : vector<8x32xf32>
    %c0_12 = arith.constant 0 : index
    %c0_13 = arith.constant 0 : index
    %17 = vector.load %arg6[%c0_12, %c0_13] : memref<32x4xf32, #tpu.memory_space<vmem>>, vector<32x4xf32>
    %cst_14 = arith.constant dense<0.000000e+00> : vector<8x4xf32>
    %18 = tpu.matmul %16, %17, %cst_14 {dimension_numbers = #tpu.dot_dimension_numbers<[1], [0], [0], [1], [0, 0, 1, 1], [], []>} : vector<8x32xf32>, vector<32x4xf32>, vector<8x4xf32> -> vector<8x4xf32>
    %c0_15 = arith.constant 0 : index
    %c0_16 = arith.constant 0 : index
    %19 = vector.load %arg7[%c0_15, %c0_16] : memref<1x4xf32, #tpu.memory_space<vmem>>, vector<1x4xf32>
    %20 = vector.broadcast %19 : vector<1x4xf32> to vector<8x4xf32>
    %21 = arith.addf %18, %20 : vector<8x4xf32>
    %c0_17 = arith.constant 0 : index
    %c0_18 = arith.constant 0 : index
    %22 = vector.load %arg8[%c0_17, %c0_18] : memref<8x4xf32, #tpu.memory_space<vmem>>, vector<8x4xf32>
    tpu.vector_store %arg8[%c0_17, %c0_18], %21 {strides = array<i32>} : memref<8x4xf32, #tpu.memory_space<vmem>>, vector<8x4xf32>,
    return
  }
  func.func @transform_0(%arg0: i32) -> (i32, i32) {
    %c0_i32 = arith.constant 0 : i32
    %c0_i32_0 = arith.constant 0 : i32
    return %arg0, %c0_i32 : i32, i32
  }
  func.func @transform_1(%arg0: i32) -> (i32, i32) {
    %c0_i32 = arith.constant 0 : i32
    %c0_i32_0 = arith.constant 0 : i32
    %c0_i32_1 = arith.constant 0 : i32
    return %c0_i32, %c0_i32_0 : i32, i32
  }
  func.func @transform_2(%arg0: i32) -> (i32, i32) {
    %c0_i32 = arith.constant 0 : i32
    %c0_i32_0 = arith.constant 0 : i32
    %c0_i32_1 = arith.constant 0 : i32
    return %c0_i32, %c0_i32_0 : i32, i32
  }
  func.func @transform_3(%arg0: i32) -> (i32, i32) {
    %c0_i32 = arith.constant 0 : i32
    %c0_i32_0 = arith.constant 0 : i32
    %c0_i32_1 = arith.constant 0 : i32
    return %c0_i32, %c0_i32_0 : i32, i32
  }
  func.func @transform_4(%arg0: i32) -> (i32, i32) {
    %c0_i32 = arith.constant 0 : i32
    %c0_i32_0 = arith.constant 0 : i32
    %c0_i32_1 = arith.constant 0 : i32
    return %c0_i32, %c0_i32_0 : i32, i32
  }
  func.func @transform_5(%arg0: i32) -> (i32, i32) {
    %c0_i32 = arith.constant 0 : i32
    %c0_i32_0 = arith.constant 0 : i32
    %c0_i32_1 = arith.constant 0 : i32
    return %c0_i32, %c0_i32_0 : i32, i32
  }
  func.func @transform_6(%arg0: i32) -> (i32, i32) {
    %c0_i32 = arith.constant 0 : i32
    %c0_i32_0 = arith.constant 0 : i32
    %c0_i32_1 = arith.constant 0 : i32
    return %c0_i32, %c0_i32_0 : i32, i32
  }
  func.func @transform_7(%arg0: i32) -> (i32, i32) {
    %c0_i32 = arith.constant 0 : i32
    %c0_i32_0 = arith.constant 0 : i32
    return %arg0, %c0_i32 : i32, i32
  }
}

</mosaic_0001>

<llo_original>
// kernel: tpu_custom_call.1
$region0: #{tpu_custom_call.1}
  #allocation0 [shape = 'u32[]', space=smem, size = 0x4, offset = 0x4, fixed_abs, tag = 'smem constant byte address 0x4 - core index']
  #allocation1 [shape = 'u32[72,128]{1,0:T(1,128)}', space=vmem, size = 0x9000, scoped, tag = 'internal scratch']
  %s0 = inlined_call_operand.vmem [shape: f32[8,16], index: 0, kind: input, shape index: {}]
  %s1 = inlined_call_operand.vmem [shape: bf16[16,64], index: 1, kind: input, shape index: {}]
  %s2 = inlined_call_operand.vmem [shape: f32[1,64], index: 2, kind: input, shape index: {}]
  %s3 = inlined_call_operand.vmem [shape: bf16[64,32], index: 3, kind: input, shape index: {}]
  %s4 = inlined_call_operand.vmem [shape: f32[1,32], index: 4, kind: input, shape index: {}]
  %s5 = inlined_call_operand.vmem [shape: f32[32,4], index: 5, kind: input, shape index: {}]
  %s6 = inlined_call_operand.vmem [shape: f32[1,4], index: 6, kind: input, shape index: {}]
  %s7 = inlined_call_operand.vmem [shape: f32[8,4], index: 7, kind: output, shape index: {}]
  %s8 = sld [smem:[#allocation0]]
  $region38: #{tpu_custom_call.1} parent=0
    _
  %s10 = ssub.s32 1, %s8
  %s11 = scalar_select 0, %s10, %s8
  // Predicated region
  $region2: #{tpu_custom_call.1} parent=0 // pred_check
    _
  $region3: #{tpu_custom_call.1} parent=0 // pred_check_branch
    %13 = sbr.rel (0) target = $region5
  $region4: #{tpu_custom_call.1} parent=0 // pred_region
    _
  $region5: #{tpu_custom_call.1} parent=0 // pred_fallthru
    _
  // Predicated region
  $region6: #{tpu_custom_call.1} parent=0 // pred_check
    _
  $region7: #{tpu_custom_call.1} parent=0 // pred_check_branch
    %15 = sbr.rel (0) target = $region9
  $region8: #{tpu_custom_call.1} parent=0 // pred_region
    _
  $region9: #{tpu_custom_call.1} parent=0 // pred_fallthru
    _
  // Predicated region
  $region10: #{tpu_custom_call.1} parent=0 // pred_check
    _
  $region11: #{tpu_custom_call.1} parent=0 // pred_check_branch
    %17 = sbr.rel (0) target = $region13
  $region12: #{tpu_custom_call.1} parent=0 // pred_region
    _
  $region13: #{tpu_custom_call.1} parent=0 // pred_fallthru
    _
  // Predicated region
  $region14: #{tpu_custom_call.1} parent=0 // pred_check
    _
  $region15: #{tpu_custom_call.1} parent=0 // pred_check_branch
    %19 = sbr.rel (0) target = $region17
  $region16: #{tpu_custom_call.1} parent=0 // pred_region
    _
  $region17: #{tpu_custom_call.1} parent=0 // pred_fallthru
    _
  // Predicated region
  $region18: #{tpu_custom_call.1} parent=0 // pred_check
    _
  $region19: #{tpu_custom_call.1} parent=0 // pred_check_branch
    %21 = sbr.rel (0) target = $region21
  $region20: #{tpu_custom_call.1} parent=0 // pred_region
    _
  $region21: #{tpu_custom_call.1} parent=0 // pred_fallthru
    _
  // Predicated region
  $region22: #{tpu_custom_call.1} parent=0 // pred_check
    _
  $region23: #{tpu_custom_call.1} parent=0 // pred_check_branch
    %23 = sbr.rel (0) target = $region25
  $region24: #{tpu_custom_call.1} parent=0 // pred_region
    _
  $region25: #{tpu_custom_call.1} parent=0 // pred_fallthru
    _
  // Predicated region
  $region26: #{tpu_custom_call.1} parent=0 // pred_check
    _
  $region27: #{tpu_custom_call.1} parent=0 // pred_check_branch
    %25 = sbr.rel (0) target = $region29
  $region28: #{tpu_custom_call.1} parent=0 // pred_region
    _
  $region29: #{tpu_custom_call.1} parent=0 // pred_fallthru
    _
  %v27 = vld [vmem:[%s0] sm:$0xff]
  %v28 = vpack.c.bf16 %v27, %v27
  %v29 = vld [vmem:[%s1] sm:$0xf]
  %v30 = vld [vmem:[%s1 + $0x4] sm:$0xf]
  %v31 = vld [vmem:[%s2] sm:$0x1]
  %v33 = vperm.slane %v31, 0
  %v37 = vunpack.c.l.b16 %v29
  %v38 = vunpack.c.l.b16 %v30
  %v39 = vpack.c.b16 %v38, %v37
  %vm41 = vcmask 130048
  %v43 = vsel %vm41, %v28, 0
  %45 = vmatpush.bf16.msra.mxu0 0
  %46 = vmatpush.bf16.msra.mxu0 0
  %47 = vmatpush.bf16.msra.mxu0 0
  %48 = vmatpush.bf16.msra.mxu0 0
  %49 = vmatpush.bf16.msra.mxu0 0
  %50 = vmatpush.bf16.msra.mxu0 0
  %51 = vmatpush.bf16.msra.mxu0 0
  %52 = vmatpush.bf16.msra.mxu0 %v39
  %53 = vmatmul.bf16.gmra.mxu0 %v43
  %v54 = vpop.f32.mrf.mxu0
  %v55 = vadd.f32 %v33, %v54
  %v56 = vpop.f32.mrf.mxu0
  %57 = vdwg.mxu0
  %v58 = vmax.f32 %v55, 0.0
  %v59 = vpack.c.bf16 %v58, %v58
  %v60 = vld [vmem:[%s3] sm:$0xf]
  %v61 = vld [vmem:[%s3 + $0x4] sm:$0xf]
  %v62 = vld [vmem:[%s3 + $0x8] sm:$0xf]
  %v63 = vld [vmem:[%s3 + $0xc] sm:$0xf]
  %v64 = vld [vmem:[%s3 + $0x10] sm:$0xf]
  %v65 = vld [vmem:[%s3 + $0x14] sm:$0xf]
  %v66 = vld [vmem:[%s3 + $0x18] sm:$0xf]
  %v67 = vld [vmem:[%s3 + $0x1c] sm:$0xf]
  %v68 = vld [vmem:[%s4] sm:$0x1]
  %v70 = vperm.slane %v68, 0
  %v80 = vunpack.c.l.b16 %v60
  %v81 = vunpack.c.l.b16 %v61
  %v82 = vunpack.c.l.b16 %v62
  %v83 = vunpack.c.l.b16 %v63
  %v84 = vunpack.c.l.b16 %v64
  %v85 = vunpack.c.l.b16 %v65
  %v86 = vunpack.c.l.b16 %v66
  %v87 = vunpack.c.l.b16 %v67
  %v88 = vpack.c.b16 %v81, %v80
  %v89 = vpack.c.b16 %v83, %v82
  %v90 = vpack.c.b16 %v85, %v84
  %v91 = vpack.c.b16 %v87, %v86
  %vm96 = vcmask 523264
  %v98 = vsel %vm96, %v59, 0
  %100 = vmatpush.bf16.msra.mxu0 0
  %101 = vmatpush.bf16.msra.mxu0 0
  %102 = vmatpush.bf16.msra.mxu0 0
  %103 = vmatpush.bf16.msra.mxu0 0
  %104 = vmatpush.bf16.msra.mxu0 %v91
  %105 = vmatpush.bf16.msra.mxu0 %v90
  %106 = vmatpush.bf16.msra.mxu0 %v89
  %107 = vmatpush.bf16.msra.mxu0 %v88
  %108 = vmatmul.bf16.gmra.mxu0 %v98
  %v109 = vpop.f32.mrf.mxu0
  %v110 = vadd.f32 %v70, %v109
  %v111 = vpop.f32.mrf.mxu0
  %112 = vdwg.mxu0
  %v113 = vmax.f32 %v110, 0.0
  %v114 = vld [vmem:[%s5] sm:$0xff]
  %v115 = vld [vmem:[%s5 + $0x8] sm:$0xff]
  %v116 = vld [vmem:[%s5 + $0x10] sm:$0xff]
  %v117 = vld [vmem:[%s5 + $0x18] sm:$0xff]
  %v118 = vld [vmem:[%s6] sm:$0x1]
  %v120 = vperm.slane %v118, 0
  %vm122 = vcmask 261120
  %v124 = vsel %vm122, %v113, 0
  %126 = vmatpush.msra.mxu0 0.0
  %127 = vmatpush.msra.mxu0 0.0
  %128 = vmatpush.msra.mxu0 0.0
  %129 = vmatpush.msra.mxu0 0.0
  %130 = vmatpush.msra.mxu0 0.0
  %131 = vmatpush.msra.mxu0 0.0
  %132 = vmatpush.msra.mxu0 0.0
  %133 = vmatpush.msra.mxu0 0.0
  %134 = vmatpush.msra.mxu0 0.0
  %135 = vmatpush.msra.mxu0 0.0
  %136 = vmatpush.msra.mxu0 0.0
  %137 = vmatpush.msra.mxu0 0.0
  %138 = vmatpush.msra.mxu0 %v117
  %139 = vmatpush.msra.mxu0 %v116
  %140 = vmatpush.msra.mxu0 %v115
  %141 = vmatpush.msra.mxu0 %v114
  %142 = vmatmul.f32.gmra.mxu0 %v124
  %v143 = vpop.f32.mrf.mxu0
  %v144 = vadd.f32 %v120, %v143
  %145 = vdwg.mxu0
  %vm146 = vcmask 31744
  %147 = vst.msk [vmem:[%s7] sm:$0xff] %vm146, %v144
  // Predicated region
  $region30: #{tpu_custom_call.1} parent=0 // pred_check
    _
  $region31: #{tpu_custom_call.1} parent=0 // pred_check_branch
    %149 = sbr.rel (0) target = $region33
  $region32: #{tpu_custom_call.1} parent=0 // pred_region
    _
  $region33: #{tpu_custom_call.1} parent=0 // pred_fallthru
    _
  // Predicated region
  $region34: #{tpu_custom_call.1} parent=0 // pred_check
    _
  $region35: #{tpu_custom_call.1} parent=0 // pred_check_branch
    %151 = sbr.rel (0) target = $region37
  $region36: #{tpu_custom_call.1} parent=0 // pred_region
    _
  $region37: #{tpu_custom_call.1} parent=0 // pred_fallthru
    _

</llo_original>
